<compile_context>
chip_gen: v5e
topology: v5e:2x2
jax: 0.10.0
libtpu: 0.0.40
codegen_flags: <defaults>
</compile_context>

<pallas_src>
import functools

import jax
import jax.numpy as jnp
from jax.experimental import pallas as pl
from jax.experimental.pallas import tpu as pltpu

BN_EPS = 1e-5
# Raise v5e's 16 MiB default scoped-VMEM so the 16 MiB double-buffered weight
# block fits; this is already the default on v6e / v7x.
VMEM_LIMIT_BYTES = 32 * 1024 * 1024


# ----------------------------------------------------------------------------
# Kernel 1: fused Linear (no bias, full-K) + BatchNorm1d (batch stats) + SiLU
# ----------------------------------------------------------------------------
def _linear_bn_silu_kernel(x_ref, w_ref, gamma_ref, beta_ref, o_ref):
    # Single full-K matmul for this N tile; accumulate directly in registers /
    # output (no scratch accumulator needed since there is no K loop).
    acc = jnp.dot(x_ref[...], w_ref[...], preferred_element_type=jnp.float32)
    # BatchNorm1d, training mode: per-feature batch mean / biased variance.
    # Correct because the batch axis is never tiled (whole B in this block).
    mean = jnp.mean(acc, axis=0, keepdims=True)
    var = jnp.mean((acc - mean) ** 2, axis=0, keepdims=True)
    xhat = (acc - mean) * jax.lax.rsqrt(var + BN_EPS)
    y = xhat * gamma_ref[...] + beta_ref[...]
    # SiLU
    o_ref[...] = y * jax.nn.sigmoid(y)


def linear_bn_silu(x, w, gamma, beta, *, tn=1024):
    B, K = x.shape
    Kw, N = w.shape
    assert K == Kw
    tn = min(tn, N)
    assert N % tn == 0
    grid = (N // tn,)
    return pl.pallas_call(
        _linear_bn_silu_kernel,
        out_shape=jax.ShapeDtypeStruct((B, N), jnp.float32),
        grid_spec=pltpu.PrefetchScalarGridSpec(
            num_scalar_prefetch=0,
            grid=grid,
            in_specs=[
                # Full batch, full K: BN batch statistics stay exact.
                pl.BlockSpec((B, K), lambda n: (0, 0)),
                pl.BlockSpec((K, tn), lambda n: (0, n)),
                pl.BlockSpec((1, tn), lambda n: (0, n)),
                pl.BlockSpec((1, tn), lambda n: (0, n)),
            ],
            out_specs=pl.BlockSpec((B, tn), lambda n: (0, n)),
        ),
        compiler_params=pltpu.CompilerParams(
            dimension_semantics=("parallel",),  # N tiles shard across TCs (v7x)
            vmem_limit_bytes=VMEM_LIMIT_BYTES,
        ),
    )(x, w, gamma.reshape(1, -1), beta.reshape(1, -1))


# ----------------------------------------------------------------------------
# Kernel 2: fused final Linear (with bias) + per-categorical softmax
# ----------------------------------------------------------------------------
def _linear_bias_softmax_kernel(x_ref, w_ref, b_ref, o_ref, *, categoricals,
                                classes):
    s = jnp.dot(x_ref[...], w_ref[...], preferred_element_type=jnp.float32)
    s = s + b_ref[...]
    # Softmax over each contiguous group of `classes` lanes (== softmax over
    # dim=2 of the (B, categoricals, classes) reshape).
    pieces = []
    for c in range(categoricals):
        sc = s[:, c * classes:(c + 1) * classes]
        m = jnp.max(sc, axis=-1, keepdims=True)
        e = jnp.exp(sc - m)
        pieces.append(e / jnp.sum(e, axis=-1, keepdims=True))
    o_ref[...] = jnp.concatenate(pieces, axis=-1)


def linear_bias_softmax(x, w, b, *, categoricals, classes):
    B, K = x.shape
    Kw, N = w.shape
    assert K == Kw and N == categoricals * classes
    kernel = functools.partial(
        _linear_bias_softmax_kernel, categoricals=categoricals, classes=classes
    )
    # Tiny problem (x 64 KiB, w 256 KiB): single whole-array kernel, no grid.
    probs = pl.pallas_call(
        kernel,
        out_shape=jax.ShapeDtypeStruct((B, N), jnp.float32),
    )(x, w, b.reshape(1, -1))
    # Free row-major reshape outside the kernel (keeps the kernel's output
    # store as lane-dense as this head allows).
    return probs.reshape(B, categoricals, classes)


# ----------------------------------------------------------------------------
# BWM module (forward only) built from the kernels above
# ----------------------------------------------------------------------------
class BWMPallas:
    def __init__(self, *, classes, categoricals, action_emb_size, num_actions,
                 ff_inner=2048, key=None):
        self.classes = classes
        self.categoricals = categoricals
        in_dim = classes * categoricals + action_emb_size
        key = jax.random.PRNGKey(0) if key is None else key
        ks = jax.random.split(key, 12)

        def lin(k, fan_in, fan_out):
            return (jax.random.normal(k, (fan_in, fan_out), jnp.float32)
                    / jnp.sqrt(jnp.float32(fan_in)))

        # action_embedding exists in the PyTorch module but is unused in
        # forward().
        self.action_embedding = (
            jax.random.normal(ks[0], (num_actions, action_emb_size),
                              jnp.float32)
        )

        self.w1 = lin(ks[1], in_dim, ff_inner)
        self.g1 = 1.0 + 0.1 * jax.random.normal(ks[2], (ff_inner,), jnp.float32)
        self.b1 = 0.1 * jax.random.normal(ks[3], (ff_inner,), jnp.float32)

        self.w2 = lin(ks[4], ff_inner, ff_inner)
        self.g2 = 1.0 + 0.1 * jax.random.normal(ks[5], (ff_inner,), jnp.float32)
        self.b2 = 0.1 * jax.random.normal(ks[6], (ff_inner,), jnp.float32)

        self.w3 = lin(ks[7], ff_inner, ff_inner)
        self.g3 = 1.0 + 0.1 * jax.random.normal(ks[8], (ff_inner,), jnp.float32)
        self.b3 = 0.1 * jax.random.normal(ks[9], (ff_inner,), jnp.float32)

        self.w4 = lin(ks[10], ff_inner, categoricals * classes)
        self.b4 = 0.1 * jax.random.normal(
            ks[11], (categoricals * classes,), jnp.float32)

        self.in_dim = in_dim
        self.ff_inner = ff_inner

    def forward(self, x):
        # Batch axis is never tiled (required for exact BatchNorm stats).
        h = linear_bn_silu(x, self.w1, self.g1, self.b1, tn=1024)
        h = linear_bn_silu(h, self.w2, self.g2, self.b2, tn=1024)
        h = linear_bn_silu(h, self.w3, self.g3, self.b3, tn=1024)
        return linear_bias_softmax(
            h, self.w4, self.b4,
            categoricals=self.categoricals, classes=self.classes)

    # TODO(synk): sample() uses OneHotCategoricalStraightThrough rsample
    # (stochastic straight-through gradients); not part of forward(), omitted.

    # Pure-JAX reference of the same forward pass (for verification).
    def forward_ref(self, x):
        def block(h, w, g, b):
            z = h @ w
            mean = z.mean(axis=0, keepdims=True)
            var = ((z - mean) ** 2).mean(axis=0, keepdims=True)
            z = (z - mean) / jnp.sqrt(var + BN_EPS) * g + b
            return z * jax.nn.sigmoid(z)

        h = block(x, self.w1, self.g1, self.b1)
        h = block(h, self.w2, self.g2, self.b2)
        h = block(h, self.w3, self.g3, self.b3)
        scores = h @ self.w4 + self.b4
        scores = scores.reshape(x.shape[0], self.categoricals, self.classes)
        return jax.nn.softmax(scores, axis=-1)


if __name__ == "__main__":
    # Small, shape-consistent config (args): classes=8, categoricals=4,
    # action_emb_size=32, num_actions=6  =>  input dim = 8*4 + 32 = 64.
    classes, categoricals, action_emb_size, num_actions = 8, 4, 32, 6
    batch = 8

    model = BWMPallas(
        classes=classes,
        categoricals=categoricals,
        action_emb_size=action_emb_size,
        num_actions=num_actions,
        key=jax.random.PRNGKey(0),
    )

    x = jax.random.normal(
        jax.random.PRNGKey(1), (batch, model.in_dim), jnp.float32
    )

    out = model.forward(x)
    out = jax.block_until_ready(out)

    assert out.shape == (batch, categoricals, classes), out.shape
    ref = jax.block_until_ready(model.forward_ref(x))
    assert jnp.allclose(out, ref, rtol=1e-4, atol=1e-4), (
        float(jnp.max(jnp.abs(out - ref)))
    )
    # softmax rows sum to 1
    assert jnp.allclose(out.sum(axis=-1), 1.0, atol=1e-4)

    print("KERNEL_OK")
</pallas_src>

<mosaic_0001>
module attributes {stable_mosaic.version = 11 : i64} {
  func.func @_linear_bn_silu_kernel(%arg0: i32, %arg1: memref<8x64xf32, #tpu.memory_space<vmem>>, %arg2: memref<64x1024xf32, #tpu.memory_space<vmem>>, %arg3: memref<1x1024xf32, #tpu.memory_space<vmem>>, %arg4: memref<1x1024xf32, #tpu.memory_space<vmem>>, %arg5: memref<8x1024xf32, #tpu.memory_space<vmem>>) attributes {dimension_semantics = [#tpu.dimension_semantics<parallel>], iteration_bounds = array<i64: 2>, scalar_prefetch = 0 : i64, scratch_operands = 0 : i64, tpu.core_type = #tpu.core_type<tc>, window_params = [{pipeline_mode = #tpu.pipeline_mode<synchronous>, transform_indices = @transform_0, window_bounds = array<i64: 8, 64>}, {transform_indices = @transform_1, window_bounds = array<i64: 64, 1024>}, {transform_indices = @transform_2, window_bounds = array<i64: 1, 1024>}, {transform_indices = @transform_3, window_bounds = array<i64: 1, 1024>}, {transform_indices = @transform_4, window_bounds = array<i64: 8, 1024>}]} {
    %c0 = arith.constant 0 : index
    %c0_0 = arith.constant 0 : index
    %0 = vector.load %arg1[%c0, %c0_0] : memref<8x64xf32, #tpu.memory_space<vmem>>, vector<8x64xf32>
    %c0_1 = arith.constant 0 : index
    %c0_2 = arith.constant 0 : index
    %1 = vector.load %arg2[%c0_1, %c0_2] : memref<64x1024xf32, #tpu.memory_space<vmem>>, vector<64x1024xf32>
    %cst = arith.constant dense<0.000000e+00> : vector<8x1024xf32>
    %2 = tpu.matmul %0, %1, %cst {dimension_numbers = #tpu.dot_dimension_numbers<[1], [0], [0], [1], [0, 0, 1, 1], [], []>} : vector<8x64xf32>, vector<64x1024xf32>, vector<8x1024xf32> -> vector<8x1024xf32>
    %cst_3 = arith.constant dense<0.000000e+00> : vector<1024xf32>
    %3 = vector.multi_reduction <add>, %2, %cst_3 [0] : vector<8x1024xf32> to vector<1024xf32>
    %4 = vector.shape_cast %3 : vector<1024xf32> to vector<1x1024xf32>
    %cst_4 = arith.constant 8.000000e+00 : f32
    %5 = vector.broadcast %cst_4 : f32 to vector<1x1024xf32>
    %6 = arith.divf %4, %5 : vector<1x1024xf32>
    %7 = vector.broadcast %6 : vector<1x1024xf32> to vector<8x1024xf32>
    %8 = arith.subf %2, %7 : vector<8x1024xf32>
    %9 = arith.mulf %8, %8 : vector<8x1024xf32>
    %cst_5 = arith.constant dense<0.000000e+00> : vector<1024xf32>
    %10 = vector.multi_reduction <add>, %9, %cst_5 [0] : vector<8x1024xf32> to vector<1024xf32>
    %11 = vector.shape_cast %10 : vector<1024xf32> to vector<1x1024xf32>
    %cst_6 = arith.constant 8.000000e+00 : f32
    %12 = vector.broadcast %cst_6 : f32 to vector<1x1024xf32>
    %13 = arith.divf %11, %12 : vector<1x1024xf32>
    %14 = vector.broadcast %6 : vector<1x1024xf32> to vector<8x1024xf32>
    %15 = arith.subf %2, %14 : vector<8x1024xf32>
    %cst_7 = arith.constant 9.99999974E-6 : f32
    %16 = vector.broadcast %cst_7 : f32 to vector<1x1024xf32>
    %17 = arith.addf %13, %16 : vector<1x1024xf32>
    %18 = math.rsqrt %17 : vector<1x1024xf32>
    %19 = vector.broadcast %18 : vector<1x1024xf32> to vector<8x1024xf32>
    %20 = arith.mulf %15, %19 : vector<8x1024xf32>
    %c0_8 = arith.constant 0 : index
    %c0_9 = arith.constant 0 : index
    %21 = vector.load %arg3[%c0_8, %c0_9] : memref<1x1024xf32, #tpu.memory_space<vmem>>, vector<1x1024xf32>
    %22 = vector.broadcast %21 : vector<1x1024xf32> to vector<8x1024xf32>
    %23 = arith.mulf %20, %22 : vector<8x1024xf32>
    %c0_10 = arith.constant 0 : index
    %c0_11 = arith.constant 0 : index
    %24 = vector.load %arg4[%c0_10, %c0_11] : memref<1x1024xf32, #tpu.memory_space<vmem>>, vector<1x1024xf32>
    %25 = vector.broadcast %24 : vector<1x1024xf32> to vector<8x1024xf32>
    %26 = arith.addf %23, %25 : vector<8x1024xf32>
    %27 = arith.negf %26 : vector<8x1024xf32>
    %28 = math.exp %27 : vector<8x1024xf32>
    %cst_12 = arith.constant 1.000000e+00 : f32
    %29 = vector.broadcast %cst_12 : f32 to vector<8x1024xf32>
    %30 = arith.addf %29, %28 : vector<8x1024xf32>
    %31 = arith.divf %29, %30 : vector<8x1024xf32>
    %32 = arith.mulf %26, %31 : vector<8x1024xf32>
    %c0_13 = arith.constant 0 : index
    %c0_14 = arith.constant 0 : index
    %33 = vector.load %arg5[%c0_13, %c0_14] : memref<8x1024xf32, #tpu.memory_space<vmem>>, vector<8x1024xf32>
    tpu.vector_store %arg5[%c0_13, %c0_14], %32 {strides = array<i32>} : memref<8x1024xf32, #tpu.memory_space<vmem>>, vector<8x1024xf32>,
    return
  }
  func.func @transform_0(%arg0: i32) -> (i32, i32) {
    %c0_i32 = arith.constant 0 : i32
    %c0_i32_0 = arith.constant 0 : i32
    %c0_i32_1 = arith.constant 0 : i32
    return %c0_i32, %c0_i32_0 : i32, i32
  }
  func.func @transform_1(%arg0: i32) -> (i32, i32) {
    %c0_i32 = arith.constant 0 : i32
    %c0_i32_0 = arith.constant 0 : i32
    return %c0_i32, %arg0 : i32, i32
  }
  func.func @transform_2(%arg0: i32) -> (i32, i32) {
    %c0_i32 = arith.constant 0 : i32
    %c0_i32_0 = arith.constant 0 : i32
    return %c0_i32, %arg0 : i32, i32
  }
  func.func @transform_3(%arg0: i32) -> (i32, i32) {
    %c0_i32 = arith.constant 0 : i32
    %c0_i32_0 = arith.constant 0 : i32
    return %c0_i32, %arg0 : i32, i32
  }
  func.func @transform_4(%arg0: i32) -> (i32, i32) {
    %c0_i32 = arith.constant 0 : i32
    %c0_i32_0 = arith.constant 0 : i32
    return %c0_i32, %arg0 : i32, i32
  }
}

</mosaic_0001>

<llo_original>
// kernel: tpu_custom_call.1
$region0: #{tpu_custom_call.1}
  #allocation0 [shape = 'u32[]', space=smem, size = 0x4, offset = 0x4, fixed_abs, tag = 'smem constant byte address 0x4 - core index']
  #allocation1 [shape = 'u32[72,128]{1,0:T(1,128)}', space=vmem, size = 0x9000, scoped, tag = 'internal scratch']
  %s0 = inlined_call_operand.hbm [shape: f32[8,64], index: 0, kind: input, shape index: {}]
  %s1 = inlined_call_operand.hbm [shape: f32[64,2048], index: 1, kind: input, shape index: {}]
  %s2 = inlined_call_operand.hbm [shape: f32[1,2048], index: 2, kind: input, shape index: {}]
  %s3 = inlined_call_operand.hbm [shape: f32[1,2048], index: 3, kind: input, shape index: {}]
  %s4 = inlined_call_operand.hbm [shape: f32[8,2048], index: 4, kind: output, shape index: {}]
  %s5 = sld [smem:[#allocation0]]
  $region65: #{tpu_custom_call.1} parent=0
    _
  %s7 = ssub.s32 1, %s5
  %s8 = scalar_select 0, %s7, %s5
  $region1: #{tpu_custom_call.1} parent=0
    #allocation2 [shape = 'u8[4096]{0}', space=vmem, size = 0x1000, scoped, tag = 'input window, operand 0, single buffered']
    #allocation3 [shape = 's32[2]{0}', space=sflag, size = 0x8, scoped, tag = 'scoped memory for tpu_custom_call.1']
    #allocation4 [shape = 's32[2]{0}', space=sflag, size = 0x8, scoped, tag = 'scoped memory for tpu_custom_call.1']
    #allocation5 [shape = 'u8[524288]{0}', space=vmem, size = 0x80000, scoped, tag = 'input window, operand 1']
    #allocation6 [shape = 's32[2]{0}', space=sflag, size = 0x8, scoped, tag = 'scoped memory for tpu_custom_call.1']
    #allocation7 [shape = 'u8[8192]{0}', space=vmem, size = 0x2000, scoped, tag = 'input window, operand 2']
    #allocation8 [shape = 'u8[8192]{0}', space=vmem, size = 0x2000, scoped, tag = 'input window, operand 3']
    #allocation9 [shape = 's32[2]{0}', space=sflag, size = 0x8, scoped, tag = 'scoped memory for tpu_custom_call.1']
    #allocation10 [shape = 'u8[65536]{0}', space=vmem, size = 0x10000, scoped, tag = 'output window, operand 0']
    %9 = vsyncpa [#allocation3], 0
    %10 = vsyncpa [#allocation6], 0
    %s11 = scalar_lea.sflag [#allocation6], 1
    %12 = vsyncpa %s11, 0
    %13 = vsyncpa [#allocation9], 0
    %s14 = scalar_lea.sflag [#allocation9], 1
    %15 = vsyncpa %s14, 0
    %16 = vsyncpa [#allocation4], 0
    %s17 = scalar_lea.sflag [#allocation4], 1
    %18 = vsyncpa %s17, 0
    loop: start=0, step=1, limit=4
    $region2: #{tpu_custom_call.1} parent=1 // loop_pre_header
      _
    $region3: #{tpu_custom_call.1} parent=1 // loop_header
      %s20 = sphi 0, %s24
      %p21 = scmp.ge.s32.totalorder %s20, 4
      %s28 = sphi 0, %s28
      %s30 = sphi 0, %s28
      %s31 = sphi 0, %s30
      %s45 = sphi 0, %s31
      %s51 = sphi 0, %s53
      %s54 = sphi 0, %s51
      %s55 = sphi 0, %s54
      %s71 = sphi 0, %s55
      %s77 = sphi 0, %s79
      %s80 = sphi 0, %s77
      %s81 = sphi 0, %s80
      %s97 = sphi 0, %s81
      %s103 = sphi 0, %s105
      %s106 = sphi 0, %s103
      %s107 = sphi 0, %s106
      %s123 = sphi 0, %s107
      %s129 = sphi 0, %s131
      %s132 = sphi 0, %s129
      %s133 = sphi 0, %s132
      %s149 = sphi 0, %s133
    $region4: #{tpu_custom_call.1} parent=1 // loop_header_branch
      %23 = sbr.rel (%p21) target = $region8
    $region5: #{tpu_custom_call.1} parent=1 // loop_body
      %s25 = ssub.s32 %s20, 1
      %s26 = ssub.s32 %s20, 2
      %s27 = sadd.s32 %s20, 1
      %s29 = sadd.s32 %s28, 1
      %p32 = scmp.eq.s32.totalorder %s20, 1
      %p33 = scmp.ne.s32.totalorder %s28, %s30
      %p34 = scmp.eq.s32.totalorder %s20, 0
      %p35 = por %p33, %p34
      %p36 = scmp.ne.s32.totalorder %s28, %s30
      %p37 = scmp.eq.s32.totalorder %s25, 1
      %p38 = por %p36, %p37
      %p39 = scmp.ne.s32.totalorder %s30, %s31
      %p40 = scmp.eq.s32.totalorder %s25, 0
      %p41 = por %p39, %p40
      %p42 = scmp.ne.s32.totalorder %s30, %s31
      %p43 = scmp.eq.s32.totalorder %s26, 1
      %p44 = por %p42, %p43
      %p46 = scmp.ne.s32.totalorder %s31, %s45
      %p47 = scmp.eq.s32.totalorder %s26, 0
      %p48 = por %p46, %p47
      %s49 = ssub.s32 %s20, %s27
      %p50 = scmp.eq.s32.totalorder %s49, 0
      %s52 = sadd.s32 %s51, 1
      %s53 = scalar_select %p50, %s51, %s52
      %p56 = pneg %p50
      %p57 = scmp.eq.s32.totalorder %s20, 1
      %p58 = por %p56, %p57
      %p59 = scmp.ne.s32.totalorder %s51, %s54
      %p60 = scmp.eq.s32.totalorder %s20, 0
      %p61 = por %p59, %p60
      %p62 = scmp.ne.s32.totalorder %s51, %s54
      %p63 = scmp.eq.s32.totalorder %s25, 1
      %p64 = por %p62, %p63
      %p65 = scmp.ne.s32.totalorder %s54, %s55
      %p66 = scmp.eq.s32.totalorder %s25, 0
      %p67 = por %p65, %p66
      %p68 = scmp.ne.s32.totalorder %s54, %s55
      %p69 = scmp.eq.s32.totalorder %s26, 1
      %p70 = por %p68, %p69
      %p72 = scmp.ne.s32.totalorder %s55, %s71
      %p73 = scmp.eq.s32.totalorder %s26, 0
      %p74 = por %p72, %p73
      %s75 = ssub.s32 %s20, %s27
      %p76 = scmp.eq.s32.totalorder %s75, 0
      %s78 = sadd.s32 %s77, 1
      %s79 = scalar_select %p76, %s77, %s78
      %p82 = pneg %p76
      %p83 = scmp.eq.s32.totalorder %s20, 1
      %p84 = por %p82, %p83
      %p85 = scmp.ne.s32.totalorder %s77, %s80
      %p86 = scmp.eq.s32.totalorder %s20, 0
      %p87 = por %p85, %p86
      %p88 = scmp.ne.s32.totalorder %s77, %s80
      %p89 = scmp.eq.s32.totalorder %s25, 1
      %p90 = por %p88, %p89
      %p91 = scmp.ne.s32.totalorder %s80, %s81
      %p92 = scmp.eq.s32.totalorder %s25, 0
      %p93 = por %p91, %p92
      %p94 = scmp.ne.s32.totalorder %s80, %s81
      %p95 = scmp.eq.s32.totalorder %s26, 1
      %p96 = por %p94, %p95
      %p98 = scmp.ne.s32.totalorder %s81, %s97
      %p99 = scmp.eq.s32.totalorder %s26, 0
      %p100 = por %p98, %p99
      %s101 = ssub.s32 %s20, %s27
      %p102 = scmp.eq.s32.totalorder %s101, 0
      %s104 = sadd.s32 %s103, 1
      %s105 = scalar_select %p102, %s103, %s104
      %p108 = pneg %p102
      %p109 = scmp.eq.s32.totalorder %s20, 1
      %p110 = por %p108, %p109
      %p111 = scmp.ne.s32.totalorder %s103, %s106
      %p112 = scmp.eq.s32.totalorder %s20, 0
      %p113 = por %p111, %p112
      %p114 = scmp.ne.s32.totalorder %s103, %s106
      %p115 = scmp.eq.s32.totalorder %s25, 1
      %p116 = por %p114, %p115
      %p117 = scmp.ne.s32.totalorder %s106, %s107
      %p118 = scmp.eq.s32.totalorder %s25, 0
      %p119 = por %p117, %p118
      %p120 = scmp.ne.s32.totalorder %s106, %s107
      %p121 = scmp.eq.s32.totalorder %s26, 1
      %p122 = por %p120, %p121
      %p124 = scmp.ne.s32.totalorder %s107, %s123
      %p125 = scmp.eq.s32.totalorder %s26, 0
      %p126 = por %p124, %p125
      %s127 = ssub.s32 %s20, %s27
      %p128 = scmp.eq.s32.totalorder %s127, 0
      %s130 = sadd.s32 %s129, 1
      %s131 = scalar_select %p128, %s129, %s130
      %p134 = pneg %p128
      %p135 = scmp.eq.s32.totalorder %s20, 1
      %p136 = por %p134, %p135
      %p137 = scmp.ne.s32.totalorder %s129, %s132
      %p138 = scmp.eq.s32.totalorder %s20, 0
      %p139 = por %p137, %p138
      %p140 = scmp.ne.s32.totalorder %s129, %s132
      %p141 = scmp.eq.s32.totalorder %s25, 1
      %p142 = por %p140, %p141
      %p143 = scmp.ne.s32.totalorder %s132, %s133
      %p144 = scmp.eq.s32.totalorder %s25, 0
      %p145 = por %p143, %p144
      %p146 = scmp.ne.s32.totalorder %s132, %s133
      %p147 = scmp.eq.s32.totalorder %s26, 1
      %p148 = por %p146, %p147
      %p150 = scmp.ne.s32.totalorder %s133, %s149
      %p151 = scmp.eq.s32.totalorder %s26, 0
      %p152 = por %p150, %p151
      %p153 = scmp.le.s32.totalorder 1, %s20
      %p154 = scmp.lt.s32.totalorder %s20, 3
      %p155 = pnand %p153, %p154
      %p156 = pneg %p155
      // Predicated region
      $region9: #{tpu_custom_call.1} parent=5 // pred_check
        _
      $region10: #{tpu_custom_call.1} parent=5 // pred_check_branch
        %158 = sbr.rel (%p155) target = $region12
      $region11: #{tpu_custom_call.1} parent=5 // pred_region
        %s159 = ssub.s32 %s20, 1
        // Predicated region
        $region13: #{tpu_custom_call.1} parent=11 // pred_check
          %p160 = pneg %p41
        $region14: #{tpu_custom_call.1} parent=11 // pred_check_branch
          %162 = sbr.rel (%p160) target = $region16
        $region15: #{tpu_custom_call.1} parent=11 // pred_region
          %164 = vsyncadd [#allocation3], 0
          %s166 = sshll.u32 %s0, 4
          %s167 = int_to_ptr.hbm [resolvable:$true] %s166
          %s168 = sshll.u32 [#allocation2], 4
          %s169 = int_to_ptr.vmem [resolvable:$true] %s168
          %171 = dma.hbm_to_vmem [thread:$0]  %s167, 128, %s169, [#allocation3]
        $region16: #{tpu_custom_call.1} parent=11 // pred_fallthru
          _
      $region12: #{tpu_custom_call.1} parent=5 // pred_fallthru
        _
      %p172 = scmp.lt.s32.totalorder %s20, 2
      // Predicated region
      $region17: #{tpu_custom_call.1} parent=5 // pred_check
        %p173 = pneg %p172
      $region18: #{tpu_custom_call.1} parent=5 // pred_check_branch
        %175 = sbr.rel (%p173) target = $region20
      $region19: #{tpu_custom_call.1} parent=5 // pred_region
        // Predicated region
        $region21: #{tpu_custom_call.1} parent=19 // pred_check
          %p176 = pneg %p61
        $region22: #{tpu_custom_call.1} parent=19 // pred_check_branch
          %178 = sbr.rel (%p176) target = $region24
        $region23: #{tpu_custom_call.1} parent=19 // pred_region
          %s179 = sand.u32 %s20, 1
          %s180 = scalar_lea.sflag [#allocation6], %s179
          %s181 = sand.u32 %s51, 1
          %s182 = smul.addr %s181, 512
          %s183 = scalar_lea.vmem [#allocation5], %s182
          %s184 = smul.u32 8, %s20
          %186 = vsyncadd %s180, 0
          %s187 = smul.addr %s184, 8
          %s188 = scalar_lea.hbm %s1, %s187
          %s189 = sshll.u32 %s188, 4
          %s190 = int_to_ptr.hbm [resolvable:$true] %s189
          %s191 = sshll.u32 %s183, 4
          %s192 = int_to_ptr.vmem [resolvable:$true] %s191
          %197 = dma.hbm_to_vmem [thread:$0]  %s190, 8192, %s192, %s180, 2048, 1024, 64
        $region24: #{tpu_custom_call.1} parent=19 // pred_fallthru
          _
        // Predicated region
        $region25: #{tpu_custom_call.1} parent=19 // pred_check
          %p198 = pneg %p87
        $region26: #{tpu_custom_call.1} parent=19 // pred_check_branch
          %200 = sbr.rel (%p198) target = $region28
        $region27: #{tpu_custom_call.1} parent=19 // pred_region
          %s201 = sand.u32 %s20, 1
          %s202 = scalar_lea.sflag [#allocation6], %s201
          %s203 = sand.u32 %s77, 1
          %s204 = smul.addr %s203, 8
          %s205 = scalar_lea.vmem [#allocation7], %s204
          %s206 = smul.u32 8, %s20
          %208 = vsyncadd %s202, 0
          %s209 = scalar_lea.hbm %s2, %s206
          %s211 = sshll.u32 %s209, 4
          %s212 = int_to_ptr.hbm [resolvable:$true] %s211
          %s213 = sshll.u32 %s205, 4
          %s214 = int_to_ptr.vmem [resolvable:$true] %s213
          %216 = dma.hbm_to_vmem [thread:$0]  %s212, 128, %s214, %s202
        $region28: #{tpu_custom_call.1} parent=19 // pred_fallthru
          _
        // Predicated region
        $region29: #{tpu_custom_call.1} parent=19 // pred_check
          %p217 = pneg %p113
        $region30: #{tpu_custom_call.1} parent=19 // pred_check_branch
          %219 = sbr.rel (%p217) target = $region32
        $region31: #{tpu_custom_call.1} parent=19 // pred_region
          %s220 = sand.u32 %s103, 1
          %s221 = scalar_lea.sflag [#allocation9], %s220
          %s222 = sand.u32 %s103, 1
          %s223 = smul.addr %s222, 8
          %s224 = scalar_lea.vmem [#allocation8], %s223
          %s225 = smul.u32 8, %s20
          %227 = vsyncadd %s221, 0
          %s228 = scalar_lea.hbm %s3, %s225
          %s230 = sshll.u32 %s228, 4
          %s231 = int_to_ptr.hbm [resolvable:$true] %s230
          %s232 = sshll.u32 %s224, 4
          %s233 = int_to_ptr.vmem [resolvable:$true] %s232
          %235 = dma.hbm_to_vmem [thread:$0]  %s231, 128, %s233, %s221
        $region32: #{tpu_custom_call.1} parent=19 // pred_fallthru
          _
      $region20: #{tpu_custom_call.1} parent=5 // pred_fallthru
        _
      %p236 = scmp.le.s32.totalorder 1, %s20
      %p237 = scmp.lt.s32.totalorder %s20, 3
      %p238 = pnand %p236, %p237
      %p239 = pneg %p238
      // Predicated region
      $region33: #{tpu_custom_call.1} parent=5 // pred_check
        _
      $region34: #{tpu_custom_call.1} parent=5 // pred_check_branch
        %241 = sbr.rel (%p238) target = $region36
      $region35: #{tpu_custom_call.1} parent=5 // pred_region
        %s242 = ssub.s32 %s20, 1
        // Predicated region
        $region37: #{tpu_custom_call.1} parent=35 // pred_check
          %p243 = pneg %p41
        $region38: #{tpu_custom_call.1} parent=35 // pred_check_branch
          %245 = sbr.rel (%p243) target = $region40
        $region39: #{tpu_custom_call.1} parent=35 // pred_region
          %247 = dma.done [#allocation3], 128
        $region40: #{tpu_custom_call.1} parent=35 // pred_fallthru
          _
        %s248 = sand.u32 %s25, 1
        %s249 = scalar_lea.sflag [#allocation6], %s248
        %s250 = sand.u32 %s54, 1
        %s251 = smul.addr %s250, 512
        %s252 = scalar_lea.vmem [#allocation5], %s251
        // Predicated region
        $region41: #{tpu_custom_call.1} parent=35 // pred_check
          %p253 = pneg %p67
        $region42: #{tpu_custom_call.1} parent=35 // pred_check_branch
          %255 = sbr.rel (%p253) target = $region44
        $region43: #{tpu_custom_call.1} parent=35 // pred_region
          %257 = dma.done %s249, 8192
        $region44: #{tpu_custom_call.1} parent=35 // pred_fallthru
          _
        %s258 = sand.u32 %s25, 1
        %s259 = scalar_lea.sflag [#allocation6], %s258
        %s260 = sand.u32 %s80, 1
        %s261 = smul.addr %s260, 8
        %s262 = scalar_lea.vmem [#allocation7], %s261
        // Predicated region
        $region45: #{tpu_custom_call.1} parent=35 // pred_check
          %p263 = pneg %p93
        $region46: #{tpu_custom_call.1} parent=35 // pred_check_branch
          %265 = sbr.rel (%p263) target = $region48
        $region47: #{tpu_custom_call.1} parent=35 // pred_region
          %267 = dma.done %s259, 128
        $region48: #{tpu_custom_call.1} parent=35 // pred_fallthru
          _
        %s268 = sand.u32 %s106, 1
        %s269 = scalar_lea.sflag [#allocation9], %s268
        %s270 = sand.u32 %s106, 1
        %s271 = smul.addr %s270, 8
        %s272 = scalar_lea.vmem [#allocation8], %s271
        // Predicated region
        $region49: #{tpu_custom_call.1} parent=35 // pred_check
          %p273 = pneg %p119
        $region50: #{tpu_custom_call.1} parent=35 // pred_check_branch
          %275 = sbr.rel (%p273) target = $region52
        $region51: #{tpu_custom_call.1} parent=35 // pred_region
          %277 = dma.done %s269, 128
        $region52: #{tpu_custom_call.1} parent=35 // pred_fallthru
          _
        %p278 = pneg %p41
        %p279 = pneg %p38
        %s280 = sand.u32 %s25, 1
        %s281 = scalar_lea.sflag [#allocation6], %s280
        %s282 = sand.u32 %s54, 1
        %s283 = smul.addr %s282, 512
        %s284 = scalar_lea.vmem [#allocation5], %s283
        %p285 = pneg %p67
        %p286 = pneg %p64
        %s287 = sand.u32 %s25, 1
        %s288 = scalar_lea.sflag [#allocation6], %s287
        %s289 = sand.u32 %s80, 1
        %s290 = smul.addr %s289, 8
        %s291 = scalar_lea.vmem [#allocation7], %s290
        %p292 = pneg %p93
        %p293 = pneg %p90
        %s294 = sand.u32 %s106, 1
        %s295 = scalar_lea.sflag [#allocation9], %s294
        %s296 = sand.u32 %s106, 1
        %s297 = smul.addr %s296, 8
        %s298 = scalar_lea.vmem [#allocation8], %s297
        %p299 = pneg %p119
        %p300 = pneg %p116
        %p301 = pneg %p145
        %p302 = pneg %p142
        %s303 = sand.u32 %s132, 1
        %s304 = scalar_lea.sflag [#allocation4], %s303
        %s305 = sand.u32 %s132, 1
        %s306 = smul.addr %s305, 64
        %s307 = scalar_lea.vmem [#allocation10], %s306
        %s308 = smul.u32 8, %s25
        %s309 = smul.u32 8, %s25
        %s310 = smul.u32 8, %s25
        %s311 = smul.u32 8, %s25
        %v312 = vld [vmem:[#allocation2] sm:$0xff]
        %v313 = vld [vmem:[%s252] sm:$0xff]
        %v314 = vld [vmem:[%s252 + $0x8] sm:$0xff]
        %v315 = vld [vmem:[%s252 + $0x10] sm:$0xff]
        %v316 = vld [vmem:[%s252 + $0x18] sm:$0xff]
        %v317 = vld [vmem:[%s252 + $0x20] sm:$0xff]
        %v318 = vld [vmem:[%s252 + $0x28] sm:$0xff]
        %v319 = vld [vmem:[%s252 + $0x30] sm:$0xff]
        %v320 = vld [vmem:[%s252 + $0x38] sm:$0xff]
        %v321 = vld [vmem:[%s252 + $0x40] sm:$0xff]
        %v322 = vld [vmem:[%s252 + $0x48] sm:$0xff]
        %v323 = vld [vmem:[%s252 + $0x50] sm:$0xff]
        %v324 = vld [vmem:[%s252 + $0x58] sm:$0xff]
        %v325 = vld [vmem:[%s252 + $0x60] sm:$0xff]
        %v326 = vld [vmem:[%s252 + $0x68] sm:$0xff]
        %v327 = vld [vmem:[%s252 + $0x70] sm:$0xff]
        %v328 = vld [vmem:[%s252 + $0x78] sm:$0xff]
        %v329 = vld [vmem:[%s252 + $0x80] sm:$0xff]
        %v330 = vld [vmem:[%s252 + $0x88] sm:$0xff]
        %v331 = vld [vmem:[%s252 + $0x90] sm:$0xff]
        %v332 = vld [vmem:[%s252 + $0x98] sm:$0xff]
        %v333 = vld [vmem:[%s252 + $0xa0] sm:$0xff]
        %v334 = vld [vmem:[%s252 + $0xa8] sm:$0xff]
        %v335 = vld [vmem:[%s252 + $0xb0] sm:$0xff]
        %v336 = vld [vmem:[%s252 + $0xb8] sm:$0xff]
        %v337 = vld [vmem:[%s252 + $0xc0] sm:$0xff]
        %v338 = vld [vmem:[%s252 + $0xc8] sm:$0xff]
        %v339 = vld [vmem:[%s252 + $0xd0] sm:$0xff]
        %v340 = vld [vmem:[%s252 + $0xd8] sm:$0xff]
        %v341 = vld [vmem:[%s252 + $0xe0] sm:$0xff]
        %v342 = vld [vmem:[%s252 + $0xe8] sm:$0xff]
        %v343 = vld [vmem:[%s252 + $0xf0] sm:$0xff]
        %v344 = vld [vmem:[%s252 + $0xf8] sm:$0xff]
        %v345 = vld [vmem:[%s252 + $0x100] sm:$0xff]
        %v346 = vld [vmem:[%s252 + $0x108] sm:$0xff]
        %v347 = vld [vmem:[%s252 + $0x110] sm:$0xff]
        %v348 = vld [vmem:[%s252 + $0x118] sm:$0xff]
        %v349 = vld [vmem:[%s252 + $0x120] sm:$0xff]
        %v350 = vld [vmem:[%s252 + $0x128] sm:$0xff]
        %v351 = vld [vmem:[%s252 + $0x130] sm:$0xff]
        %v352 = vld [vmem:[%s252 + $0x138] sm:$0xff]
        %v353 = vld [vmem:[%s252 + $0x140] sm:$0xff]
        %v354 = vld [vmem:[%s252 + $0x148] sm:$0xff]
        %v355 = vld [vmem:[%s252 + $0x150] sm:$0xff]
        %v356 = vld [vmem:[%s252 + $0x158] sm:$0xff]
        %v357 = vld [vmem:[%s252 + $0x160] sm:$0xff]
        %v358 = vld [vmem:[%s252 + $0x168] sm:$0xff]
        %v359 = vld [vmem:[%s252 + $0x170] sm:$0xff]
        %v360 = vld [vmem:[%s252 + $0x178] sm:$0xff]
        %v361 = vld [vmem:[%s252 + $0x180] sm:$0xff]
        %v362 = vld [vmem:[%s252 + $0x188] sm:$0xff]
        %v363 = vld [vmem:[%s252 + $0x190] sm:$0xff]
        %v364 = vld [vmem:[%s252 + $0x198] sm:$0xff]
        %v365 = vld [vmem:[%s252 + $0x1a0] sm:$0xff]
        %v366 = vld [vmem:[%s252 + $0x1a8] sm:$0xff]
        %v367 = vld [vmem:[%s252 + $0x1b0] sm:$0xff]
        %v368 = vld [vmem:[%s252 + $0x1b8] sm:$0xff]
        %v369 = vld [vmem:[%s252 + $0x1c0] sm:$0xff]
        %v370 = vld [vmem:[%s252 + $0x1c8] sm:$0xff]
        %v371 = vld [vmem:[%s252 + $0x1d0] sm:$0xff]
        %v372 = vld [vmem:[%s252 + $0x1d8] sm:$0xff]
        %v373 = vld [vmem:[%s252 + $0x1e0] sm:$0xff]
        %v374 = vld [vmem:[%s252 + $0x1e8] sm:$0xff]
        %v375 = vld [vmem:[%s252 + $0x1f0] sm:$0xff]
        %v376 = vld [vmem:[%s252 + $0x1f8] sm:$0xff]
        %vm377 = vcmask 523264
        %v379 = vsel %vm377, %v312, 0
        %381 = vmatpush.msra.mxu0 0.0
        %382 = vmatpush.msra.mxu0 0.0
        %383 = vmatpush.msra.mxu0 0.0
        %384 = vmatpush.msra.mxu0 0.0
        %385 = vmatpush.msra.mxu0 0.0
        %386 = vmatpush.msra.mxu0 0.0
        %387 = vmatpush.msra.mxu0 0.0
        %388 = vmatpush.msra.mxu0 0.0
        %389 = vmatpush.msra.mxu0 %v369
        %390 = vmatpush.msra.mxu0 %v361
        %391 = vmatpush.msra.mxu0 %v353
        %392 = vmatpush.msra.mxu0 %v345
        %393 = vmatpush.msra.mxu0 %v337
        %394 = vmatpush.msra.mxu0 %v329
        %395 = vmatpush.msra.mxu0 %v321
        %396 = vmatpush.msra.mxu0 %v313
        %397 = vmatmul.f32.gmra.mxu0 %v379
        %v398 = vpop.f32.mrf.mxu0
        %v399 = vadd.f32 0.0, %v398
        %400 = vdwg.mxu0
        %401 = vmatpush.msra.mxu0 0.0
        %402 = vmatpush.msra.mxu0 0.0
        %403 = vmatpush.msra.mxu0 0.0
        %404 = vmatpush.msra.mxu0 0.0
        %405 = vmatpush.msra.mxu0 0.0
        %406 = vmatpush.msra.mxu0 0.0
        %407 = vmatpush.msra.mxu0 0.0
        %408 = vmatpush.msra.mxu0 0.0
        %409 = vmatpush.msra.mxu0 %v370
        %410 = vmatpush.msra.mxu0 %v362
        %411 = vmatpush.msra.mxu0 %v354
        %412 = vmatpush.msra.mxu0 %v346
        %413 = vmatpush.msra.mxu0 %v338
        %414 = vmatpush.msra.mxu0 %v330
        %415 = vmatpush.msra.mxu0 %v322
        %416 = vmatpush.msra.mxu0 %v314
        %417 = vmatmul.f32.gmra.mxu0 %v379
        %v418 = vpop.f32.mrf.mxu0
        %v419 = vadd.f32 0.0, %v418
        %420 = vdwg.mxu0
        %421 = vmatpush.msra.mxu0 0.0
        %422 = vmatpush.msra.mxu0 0.0
        %423 = vmatpush.msra.mxu0 0.0
        %424 = vmatpush.msra.mxu0 0.0
        %425 = vmatpush.msra.mxu0 0.0
        %426 = vmatpush.msra.mxu0 0.0
        %427 = vmatpush.msra.mxu0 0.0
        %428 = vmatpush.msra.mxu0 0.0
        %429 = vmatpush.msra.mxu0 %v371
        %430 = vmatpush.msra.mxu0 %v363
        %431 = vmatpush.msra.mxu0 %v355
        %432 = vmatpush.msra.mxu0 %v347
        %433 = vmatpush.msra.mxu0 %v339
        %434 = vmatpush.msra.mxu0 %v331
        %435 = vmatpush.msra.mxu0 %v323
        %436 = vmatpush.msra.mxu0 %v315
        %437 = vmatmul.f32.gmra.mxu0 %v379
        %v438 = vpop.f32.mrf.mxu0
        %v439 = vadd.f32 0.0, %v438
        %440 = vdwg.mxu0
        %441 = vmatpush.msra.mxu0 0.0
        %442 = vmatpush.msra.mxu0 0.0
        %443 = vmatpush.msra.mxu0 0.0
        %444 = vmatpush.msra.mxu0 0.0
        %445 = vmatpush.msra.mxu0 0.0
        %446 = vmatpush.msra.mxu0 0.0
        %447 = vmatpush.msra.mxu0 0.0
        %448 = vmatpush.msra.mxu0 0.0
        %449 = vmatpush.msra.mxu0 %v372
        %450 = vmatpush.msra.mxu0 %v364
        %451 = vmatpush.msra.mxu0 %v356
        %452 = vmatpush.msra.mxu0 %v348
        %453 = vmatpush.msra.mxu0 %v340
        %454 = vmatpush.msra.mxu0 %v332
        %455 = vmatpush.msra.mxu0 %v324
        %456 = vmatpush.msra.mxu0 %v316
        %457 = vmatmul.f32.gmra.mxu0 %v379
        %v458 = vpop.f32.mrf.mxu0
        %v459 = vadd.f32 0.0, %v458
        %460 = vdwg.mxu0
        %461 = vmatpush.msra.mxu0 0.0
        %462 = vmatpush.msra.mxu0 0.0
        %463 = vmatpush.msra.mxu0 0.0
        %464 = vmatpush.msra.mxu0 0.0
        %465 = vmatpush.msra.mxu0 0.0
        %466 = vmatpush.msra.mxu0 0.0
        %467 = vmatpush.msra.mxu0 0.0
        %468 = vmatpush.msra.mxu0 0.0
        %469 = vmatpush.msra.mxu0 %v373
        %470 = vmatpush.msra.mxu0 %v365
        %471 = vmatpush.msra.mxu0 %v357
        %472 = vmatpush.msra.mxu0 %v349
        %473 = vmatpush.msra.mxu0 %v341
        %474 = vmatpush.msra.mxu0 %v333
        %475 = vmatpush.msra.mxu0 %v325
        %476 = vmatpush.msra.mxu0 %v317
        %477 = vmatmul.f32.gmra.mxu0 %v379
        %v478 = vpop.f32.mrf.mxu0
        %v479 = vadd.f32 0.0, %v478
        %480 = vdwg.mxu0
        %481 = vmatpush.msra.mxu0 0.0
        %482 = vmatpush.msra.mxu0 0.0
        %483 = vmatpush.msra.mxu0 0.0
        %484 = vmatpush.msra.mxu0 0.0
        %485 = vmatpush.msra.mxu0 0.0
        %486 = vmatpush.msra.mxu0 0.0
        %487 = vmatpush.msra.mxu0 0.0
        %488 = vmatpush.msra.mxu0 0.0
        %489 = vmatpush.msra.mxu0 %v374
        %490 = vmatpush.msra.mxu0 %v366
        %491 = vmatpush.msra.mxu0 %v358
        %492 = vmatpush.msra.mxu0 %v350
        %493 = vmatpush.msra.mxu0 %v342
        %494 = vmatpush.msra.mxu0 %v334
        %495 = vmatpush.msra.mxu0 %v326
        %496 = vmatpush.msra.mxu0 %v318
        %497 = vmatmul.f32.gmra.mxu0 %v379
        %v498 = vpop.f32.mrf.mxu0
        %v499 = vadd.f32 0.0, %v498
        %500 = vdwg.mxu0
        %501 = vmatpush.msra.mxu0 0.0
        %502 = vmatpush.msra.mxu0 0.0
        %503 = vmatpush.msra.mxu0 0.0
        %504 = vmatpush.msra.mxu0 0.0
        %505 = vmatpush.msra.mxu0 0.0
        %506 = vmatpush.msra.mxu0 0.0
        %507 = vmatpush.msra.mxu0 0.0
        %508 = vmatpush.msra.mxu0 0.0
        %509 = vmatpush.msra.mxu0 %v375
        %510 = vmatpush.msra.mxu0 %v367
        %511 = vmatpush.msra.mxu0 %v359
        %512 = vmatpush.msra.mxu0 %v351
        %513 = vmatpush.msra.mxu0 %v343
        %514 = vmatpush.msra.mxu0 %v335
        %515 = vmatpush.msra.mxu0 %v327
        %516 = vmatpush.msra.mxu0 %v319
        %517 = vmatmul.f32.gmra.mxu0 %v379
        %v518 = vpop.f32.mrf.mxu0
        %v519 = vadd.f32 0.0, %v518
        %520 = vdwg.mxu0
        %521 = vmatpush.msra.mxu0 0.0
        %522 = vmatpush.msra.mxu0 0.0
        %523 = vmatpush.msra.mxu0 0.0
        %524 = vmatpush.msra.mxu0 0.0
        %525 = vmatpush.msra.mxu0 0.0
        %526 = vmatpush.msra.mxu0 0.0
        %527 = vmatpush.msra.mxu0 0.0
        %528 = vmatpush.msra.mxu0 0.0
        %529 = vmatpush.msra.mxu0 %v376
        %530 = vmatpush.msra.mxu0 %v368
        %531 = vmatpush.msra.mxu0 %v360
        %532 = vmatpush.msra.mxu0 %v352
        %533 = vmatpush.msra.mxu0 %v344
        %534 = vmatpush.msra.mxu0 %v336
        %535 = vmatpush.msra.mxu0 %v328
        %536 = vmatpush.msra.mxu0 %v320
        %537 = vmatmul.f32.gmra.mxu0 %v379
        %v538 = vpop.f32.mrf.mxu0
        %v539 = vadd.f32 0.0, %v538
        %540 = vdwg.mxu0
        %v541 = vrot.slane %v399, 4
        %v542 = vadd.f32 %v399, %v541
        %v543 = vrot.slane %v542, 2
        %v544 = vadd.f32 %v542, %v543
        %v545 = vrot.slane %v544, 1
        %v546 = vadd.f32 %v544, %v545
        %v547 = vrot.slane %v419, 4
        %v548 = vadd.f32 %v419, %v547
        %v549 = vrot.slane %v548, 2
        %v550 = vadd.f32 %v548, %v549
        %v551 = vrot.slane %v550, 1
        %v552 = vadd.f32 %v550, %v551
        %v553 = vrot.slane %v439, 4
        %v554 = vadd.f32 %v439, %v553
        %v555 = vrot.slane %v554, 2
        %v556 = vadd.f32 %v554, %v555
        %v557 = vrot.slane %v556, 1
        %v558 = vadd.f32 %v556, %v557
        %v559 = vrot.slane %v459, 4
        %v560 = vadd.f32 %v459, %v559
        %v561 = vrot.slane %v560, 2
        %v562 = vadd.f32 %v560, %v561
        %v563 = vrot.slane %v562, 1
        %v564 = vadd.f32 %v562, %v563
        %v565 = vrot.slane %v479, 4
        %v566 = vadd.f32 %v479, %v565
        %v567 = vrot.slane %v566, 2
        %v568 = vadd.f32 %v566, %v567
        %v569 = vrot.slane %v568, 1
        %v570 = vadd.f32 %v568, %v569
        %v571 = vrot.slane %v499, 4
        %v572 = vadd.f32 %v499, %v571
        %v573 = vrot.slane %v572, 2
        %v574 = vadd.f32 %v572, %v573
        %v575 = vrot.slane %v574, 1
        %v576 = vadd.f32 %v574, %v575
        %v577 = vrot.slane %v519, 4
        %v578 = vadd.f32 %v519, %v577
        %v579 = vrot.slane %v578, 2
        %v580 = vadd.f32 %v578, %v579
        %v581 = vrot.slane %v580, 1
        %v582 = vadd.f32 %v580, %v581
        %v583 = vrot.slane %v539, 4
        %v584 = vadd.f32 %v539, %v583
        %v585 = vrot.slane %v584, 2
        %v586 = vadd.f32 %v584, %v585
        %v587 = vrot.slane %v586, 1
        %v588 = vadd.f32 %v586, %v587
        %v589 = vrcp.pop 8.0
        %v590 = vmul.f32 8.0, %v589
        %v591 = vsub.f32 1.0, %v590
        %v592 = vmul.f32 %v589, %v591
        %v593 = vadd.f32 %v589, %v592
        %vm594 = vweird.f32 %v589
        %v595 = vsel %vm594, %v589, %v593
        %v596 = vmul.f32 %v546, %v595
        %v597 = vmul.f32 %v552, %v595
        %v598 = vmul.f32 %v558, %v595
        %v599 = vmul.f32 %v564, %v595
        %v600 = vmul.f32 %v570, %v595
        %v601 = vmul.f32 %v576, %v595
        %v602 = vmul.f32 %v582, %v595
        %v603 = vmul.f32 %v588, %v595
        %v604 = vsub.f32 %v399, %v596
        %v605 = vsub.f32 %v419, %v597
        %v606 = vsub.f32 %v439, %v598
        %v607 = vsub.f32 %v459, %v599
        %v608 = vsub.f32 %v479, %v600
        %v609 = vsub.f32 %v499, %v601
        %v610 = vsub.f32 %v519, %v602
        %v611 = vsub.f32 %v539, %v603
        %v612 = vmul.f32 %v604, %v604
        %v613 = vmul.f32 %v605, %v605
        %v614 = vmul.f32 %v606, %v606
        %v615 = vmul.f32 %v607, %v607
        %v616 = vmul.f32 %v608, %v608
        %v617 = vmul.f32 %v609, %v609
        %v618 = vmul.f32 %v610, %v610
        %v619 = vmul.f32 %v611, %v611
        %v620 = vrot.slane %v612, 4
        %v621 = vadd.f32 %v612, %v620
        %v622 = vrot.slane %v621, 2
        %v623 = vadd.f32 %v621, %v622
        %v624 = vrot.slane %v623, 1
        %v625 = vadd.f32 %v623, %v624
        %v626 = vrot.slane %v613, 4
        %v627 = vadd.f32 %v613, %v626
        %v628 = vrot.slane %v627, 2
        %v629 = vadd.f32 %v627, %v628
        %v630 = vrot.slane %v629, 1
        %v631 = vadd.f32 %v629, %v630
        %v632 = vrot.slane %v614, 4
        %v633 = vadd.f32 %v614, %v632
        %v634 = vrot.slane %v633, 2
        %v635 = vadd.f32 %v633, %v634
        %v636 = vrot.slane %v635, 1
        %v637 = vadd.f32 %v635, %v636
        %v638 = vrot.slane %v615, 4
        %v639 = vadd.f32 %v615, %v638
        %v640 = vrot.slane %v639, 2
        %v641 = vadd.f32 %v639, %v640
        %v642 = vrot.slane %v641, 1
        %v643 = vadd.f32 %v641, %v642
        %v644 = vrot.slane %v616, 4
        %v645 = vadd.f32 %v616, %v644
        %v646 = vrot.slane %v645, 2
        %v647 = vadd.f32 %v645, %v646
        %v648 = vrot.slane %v647, 1
        %v649 = vadd.f32 %v647, %v648
        %v650 = vrot.slane %v617, 4
        %v651 = vadd.f32 %v617, %v650
        %v652 = vrot.slane %v651, 2
        %v653 = vadd.f32 %v651, %v652
        %v654 = vrot.slane %v653, 1
        %v655 = vadd.f32 %v653, %v654
        %v656 = vrot.slane %v618, 4
        %v657 = vadd.f32 %v618, %v656
        %v658 = vrot.slane %v657, 2
        %v659 = vadd.f32 %v657, %v658
        %v660 = vrot.slane %v659, 1
        %v661 = vadd.f32 %v659, %v660
        %v662 = vrot.slane %v619, 4
        %v663 = vadd.f32 %v619, %v662
        %v664 = vrot.slane %v663, 2
        %v665 = vadd.f32 %v663, %v664
        %v666 = vrot.slane %v665, 1
        %v667 = vadd.f32 %v665, %v666
        %v668 = vmul.f32 %v625, %v595
        %v669 = vmul.f32 %v631, %v595
        %v670 = vmul.f32 %v637, %v595
        %v671 = vmul.f32 %v643, %v595
        %v672 = vmul.f32 %v649, %v595
        %v673 = vmul.f32 %v655, %v595
        %v674 = vmul.f32 %v661, %v595
        %v675 = vmul.f32 %v667, %v595
        %v676 = vadd.f32 %v668, 1e-05
        %v677 = vadd.f32 %v669, 1e-05
        %v678 = vadd.f32 %v670, 1e-05
        %v679 = vadd.f32 %v671, 1e-05
        %v680 = vadd.f32 %v672, 1e-05
        %v681 = vadd.f32 %v673, 1e-05
        %v682 = vadd.f32 %v674, 1e-05
        %v683 = vadd.f32 %v675, 1e-05
        %v684 = vrsqrt.pop %v676
        %v685 = vmul.f32 %v684, %v676
        %v686 = vmul.f32 %v685, %v684
        %v687 = vmul.f32 0.5, %v686
        %v688 = vsub.f32 1.5, %v687
        %v689 = vmul.f32 %v684, %v688
        %vm690 = vweird.f32 %v676
        %vm691 = vweird.f32 %v684
        %vm692 = vmor %vm690, %vm691
        %v693 = vsel %vm692, %v684, %v689
        %v694 = vrsqrt.pop %v677
        %v695 = vmul.f32 %v694, %v677
        %v696 = vmul.f32 %v695, %v694
        %v697 = vmul.f32 0.5, %v696
        %v698 = vsub.f32 1.5, %v697
        %v699 = vmul.f32 %v694, %v698
        %vm700 = vweird.f32 %v677
        %vm701 = vweird.f32 %v694
        %vm702 = vmor %vm700, %vm701
        %v703 = vsel %vm702, %v694, %v699
        %v704 = vrsqrt.pop %v678
        %v705 = vmul.f32 %v704, %v678
        %v706 = vmul.f32 %v705, %v704
        %v707 = vmul.f32 0.5, %v706
        %v708 = vsub.f32 1.5, %v707
        %v709 = vmul.f32 %v704, %v708
        %vm710 = vweird.f32 %v678
        %vm711 = vweird.f32 %v704
        %vm712 = vmor %vm710, %vm711
        %v713 = vsel %vm712, %v704, %v709
        %v714 = vrsqrt.pop %v679
        %v715 = vmul.f32 %v714, %v679
        %v716 = vmul.f32 %v715, %v714
        %v717 = vmul.f32 0.5, %v716
        %v718 = vsub.f32 1.5, %v717
        %v719 = vmul.f32 %v714, %v718
        %vm720 = vweird.f32 %v679
        %vm721 = vweird.f32 %v714
        %vm722 = vmor %vm720, %vm721
        %v723 = vsel %vm722, %v714, %v719
        %v724 = vrsqrt.pop %v680
        %v725 = vmul.f32 %v724, %v680
        %v726 = vmul.f32 %v725, %v724
        %v727 = vmul.f32 0.5, %v726
        %v728 = vsub.f32 1.5, %v727
        %v729 = vmul.f32 %v724, %v728
        %vm730 = vweird.f32 %v680
        %vm731 = vweird.f32 %v724
        %vm732 = vmor %vm730, %vm731
        %v733 = vsel %vm732, %v724, %v729
        %v734 = vrsqrt.pop %v681
        %v735 = vmul.f32 %v734, %v681
        %v736 = vmul.f32 %v735, %v734
        %v737 = vmul.f32 0.5, %v736
        %v738 = vsub.f32 1.5, %v737
        %v739 = vmul.f32 %v734, %v738
        %vm740 = vweird.f32 %v681
        %vm741 = vweird.f32 %v734
        %vm742 = vmor %vm740, %vm741
        %v743 = vsel %vm742, %v734, %v739
        %v744 = vrsqrt.pop %v682
        %v745 = vmul.f32 %v744, %v682
        %v746 = vmul.f32 %v745, %v744
        %v747 = vmul.f32 0.5, %v746
        %v748 = vsub.f32 1.5, %v747
        %v749 = vmul.f32 %v744, %v748
        %vm750 = vweird.f32 %v682
        %vm751 = vweird.f32 %v744
        %vm752 = vmor %vm750, %vm751
        %v753 = vsel %vm752, %v744, %v749
        %v754 = vrsqrt.pop %v683
        %v755 = vmul.f32 %v754, %v683
        %v756 = vmul.f32 %v755, %v754
        %v757 = vmul.f32 0.5, %v756
        %v758 = vsub.f32 1.5, %v757
        %v759 = vmul.f32 %v754, %v758
        %vm760 = vweird.f32 %v683
        %vm761 = vweird.f32 %v754
        %vm762 = vmor %vm760, %vm761
        %v763 = vsel %vm762, %v754, %v759
        %v764 = vmul.f32 %v604, %v693
        %v765 = vmul.f32 %v605, %v703
        %v766 = vmul.f32 %v606, %v713
        %v767 = vmul.f32 %v607, %v723
        %v768 = vmul.f32 %v608, %v733
        %v769 = vmul.f32 %v609, %v743
        %v770 = vmul.f32 %v610, %v753
        %v771 = vmul.f32 %v611, %v763
        %v772 = vld [vmem:[%s262] sm:$0xff]
        %v774 = vperm.slane %v772, 0
        %v775 = vperm.slane %v772, 1
        %v776 = vperm.slane %v772, 2
        %v777 = vperm.slane %v772, 3
        %v778 = vperm.slane %v772, 4
        %v779 = vperm.slane %v772, 5
        %v780 = vperm.slane %v772, 6
        %v781 = vperm.slane %v772, 7
        %v790 = vmul.f32 %v764, %v774
        %v791 = vmul.f32 %v765, %v775
        %v792 = vmul.f32 %v766, %v776
        %v793 = vmul.f32 %v767, %v777
        %v794 = vmul.f32 %v768, %v778
        %v795 = vmul.f32 %v769, %v779
        %v796 = vmul.f32 %v770, %v780
        %v797 = vmul.f32 %v771, %v781
        %v798 = vld [vmem:[%s272] sm:$0xff]
        %v800 = vperm.slane %v798, 0
        %v801 = vperm.slane %v798, 1
        %v802 = vperm.slane %v798, 2
        %v803 = vperm.slane %v798, 3
        %v804 = vperm.slane %v798, 4
        %v805 = vperm.slane %v798, 5
        %v806 = vperm.slane %v798, 6
        %v807 = vperm.slane %v798, 7
        %v816 = vadd.f32 %v790, %v800
        %v817 = vadd.f32 %v791, %v801
        %v818 = vadd.f32 %v792, %v802
        %v819 = vadd.f32 %v793, %v803
        %v820 = vadd.f32 %v794, %v804
        %v821 = vadd.f32 %v795, %v805
        %v822 = vadd.f32 %v796, %v806
        %v823 = vadd.f32 %v797, %v807
        %v824 = vxor.u32 %v816, 2147483648
        %v825 = vxor.u32 %v817, 2147483648
        %v826 = vxor.u32 %v818, 2147483648
        %v827 = vxor.u32 %v819, 2147483648
        %v828 = vxor.u32 %v820, 2147483648
        %v829 = vxor.u32 %v821, 2147483648
        %v830 = vxor.u32 %v822, 2147483648
        %v831 = vxor.u32 %v823, 2147483648
        %v832 = vmul.f32 %v824, 1.442695
        %v833 = vpow.pop %v832
        %v834 = vmul.f32 %v825, 1.442695
        %v835 = vpow.pop %v834
        %v836 = vmul.f32 %v826, 1.442695
        %v837 = vpow.pop %v836
        %v838 = vmul.f32 %v827, 1.442695
        %v839 = vpow.pop %v838
        %v840 = vmul.f32 %v828, 1.442695
        %v841 = vpow.pop %v840
        %v842 = vmul.f32 %v829, 1.442695
        %v843 = vpow.pop %v842
        %v844 = vmul.f32 %v830, 1.442695
        %v845 = vpow.pop %v844
        %v846 = vmul.f32 %v831, 1.442695
        %v847 = vpow.pop %v846
        %v848 = vadd.f32 %v833, 1.0
        %v849 = vadd.f32 %v835, 1.0
        %v850 = vadd.f32 %v837, 1.0
        %v851 = vadd.f32 %v839, 1.0
        %v852 = vadd.f32 %v841, 1.0
        %v853 = vadd.f32 %v843, 1.0
        %v854 = vadd.f32 %v845, 1.0
        %v855 = vadd.f32 %v847, 1.0
        %v856 = vrcp.pop %v848
        %v857 = vmul.f32 %v848, %v856
        %v858 = vsub.f32 1.0, %v857
        %v859 = vmul.f32 %v856, %v858
        %v860 = vadd.f32 %v856, %v859
        %vm861 = vweird.f32 %v848
        %vm862 = vweird.f32 %v856
        %vm863 = vmor %vm861, %vm862
        %v864 = vsel %vm863, %v856, %v860
        %v865 = vand.u32 2147483647, %v848
        %vm866 = vcmp.eq.f32.partialorder %v865, 8.507059e+37
        %v867 = vand.u32 %v848, 2147483648
        %v868 = vor.u32 1.1754944e-38, %v867
        %v869 = vsel %vm866, %v868, %v864
        %v870 = vmul.f32 1.0, %v869
        %v871 = vrcp.pop %v849
        %v872 = vmul.f32 %v849, %v871
        %v873 = vsub.f32 1.0, %v872
        %v874 = vmul.f32 %v871, %v873
        %v875 = vadd.f32 %v871, %v874
        %vm876 = vweird.f32 %v849
        %vm877 = vweird.f32 %v871
        %vm878 = vmor %vm876, %vm877
        %v879 = vsel %vm878, %v871, %v875
        %v880 = vand.u32 2147483647, %v849
        %vm881 = vcmp.eq.f32.partialorder %v880, 8.507059e+37
        %v882 = vand.u32 %v849, 2147483648
        %v883 = vor.u32 1.1754944e-38, %v882
        %v884 = vsel %vm881, %v883, %v879
        %v885 = vmul.f32 1.0, %v884
        %v886 = vrcp.pop %v850
        %v887 = vmul.f32 %v850, %v886
        %v888 = vsub.f32 1.0, %v887
        %v889 = vmul.f32 %v886, %v888
        %v890 = vadd.f32 %v886, %v889
        %vm891 = vweird.f32 %v850
        %vm892 = vweird.f32 %v886
        %vm893 = vmor %vm891, %vm892
        %v894 = vsel %vm893, %v886, %v890
        %v895 = vand.u32 2147483647, %v850
        %vm896 = vcmp.eq.f32.partialorder %v895, 8.507059e+37
        %v897 = vand.u32 %v850, 2147483648
        %v898 = vor.u32 1.1754944e-38, %v897
        %v899 = vsel %vm896, %v898, %v894
        %v900 = vmul.f32 1.0, %v899
        %v901 = vrcp.pop %v851
        %v902 = vmul.f32 %v851, %v901
        %v903 = vsub.f32 1.0, %v902
        %v904 = vmul.f32 %v901, %v903
        %v905 = vadd.f32 %v901, %v904
        %vm906 = vweird.f32 %v851
        %vm907 = vweird.f32 %v901
        %vm908 = vmor %vm906, %vm907
        %v909 = vsel %vm908, %v901, %v905
        %v910 = vand.u32 2147483647, %v851
        %vm911 = vcmp.eq.f32.partialorder %v910, 8.507059e+37
        %v912 = vand.u32 %v851, 2147483648
        %v913 = vor.u32 1.1754944e-38, %v912
        %v914 = vsel %vm911, %v913, %v909
        %v915 = vmul.f32 1.0, %v914
        %v916 = vrcp.pop %v852
        %v917 = vmul.f32 %v852, %v916
        %v918 = vsub.f32 1.0, %v917
        %v919 = vmul.f32 %v916, %v918
        %v920 = vadd.f32 %v916, %v919
        %vm921 = vweird.f32 %v852
        %vm922 = vweird.f32 %v916
        %vm923 = vmor %vm921, %vm922
        %v924 = vsel %vm923, %v916, %v920
        %v925 = vand.u32 2147483647, %v852
        %vm926 = vcmp.eq.f32.partialorder %v925, 8.507059e+37
        %v927 = vand.u32 %v852, 2147483648
        %v928 = vor.u32 1.1754944e-38, %v927
        %v929 = vsel %vm926, %v928, %v924
        %v930 = vmul.f32 1.0, %v929
        %v931 = vrcp.pop %v853
        %v932 = vmul.f32 %v853, %v931
        %v933 = vsub.f32 1.0, %v932
        %v934 = vmul.f32 %v931, %v933
        %v935 = vadd.f32 %v931, %v934
        %vm936 = vweird.f32 %v853
        %vm937 = vweird.f32 %v931
        %vm938 = vmor %vm936, %vm937
        %v939 = vsel %vm938, %v931, %v935
        %v940 = vand.u32 2147483647, %v853
        %vm941 = vcmp.eq.f32.partialorder %v940, 8.507059e+37
        %v942 = vand.u32 %v853, 2147483648
        %v943 = vor.u32 1.1754944e-38, %v942
        %v944 = vsel %vm941, %v943, %v939
        %v945 = vmul.f32 1.0, %v944
        %v946 = vrcp.pop %v854
        %v947 = vmul.f32 %v854, %v946
        %v948 = vsub.f32 1.0, %v947
        %v949 = vmul.f32 %v946, %v948
        %v950 = vadd.f32 %v946, %v949
        %vm951 = vweird.f32 %v854
        %vm952 = vweird.f32 %v946
        %vm953 = vmor %vm951, %vm952
        %v954 = vsel %vm953, %v946, %v950
        %v955 = vand.u32 2147483647, %v854
        %vm956 = vcmp.eq.f32.partialorder %v955, 8.507059e+37
        %v957 = vand.u32 %v854, 2147483648
        %v958 = vor.u32 1.1754944e-38, %v957
        %v959 = vsel %vm956, %v958, %v954
        %v960 = vmul.f32 1.0, %v959
        %v961 = vrcp.pop %v855
        %v962 = vmul.f32 %v855, %v961
        %v963 = vsub.f32 1.0, %v962
        %v964 = vmul.f32 %v961, %v963
        %v965 = vadd.f32 %v961, %v964
        %vm966 = vweird.f32 %v855
        %vm967 = vweird.f32 %v961
        %vm968 = vmor %vm966, %vm967
        %v969 = vsel %vm968, %v961, %v965
        %v970 = vand.u32 2147483647, %v855
        %vm971 = vcmp.eq.f32.partialorder %v970, 8.507059e+37
        %v972 = vand.u32 %v855, 2147483648
        %v973 = vor.u32 1.1754944e-38, %v972
        %v974 = vsel %vm971, %v973, %v969
        %v975 = vmul.f32 1.0, %v974
        %v976 = vmul.f32 %v816, %v870
        %v977 = vmul.f32 %v817, %v885
        %v978 = vmul.f32 %v818, %v900
        %v979 = vmul.f32 %v819, %v915
        %v980 = vmul.f32 %v820, %v930
        %v981 = vmul.f32 %v821, %v945
        %v982 = vmul.f32 %v822, %v960
        %v983 = vmul.f32 %v823, %v975
        %984 = vst [vmem:[%s307] sm:$0xff] %v976
        %985 = vst [vmem:[%s307 + $0x8] sm:$0xff] %v977
        %986 = vst [vmem:[%s307 + $0x10] sm:$0xff] %v978
        %987 = vst [vmem:[%s307 + $0x18] sm:$0xff] %v979
        %988 = vst [vmem:[%s307 + $0x20] sm:$0xff] %v980
        %989 = vst [vmem:[%s307 + $0x28] sm:$0xff] %v981
        %990 = vst [vmem:[%s307 + $0x30] sm:$0xff] %v982
        %991 = vst [vmem:[%s307 + $0x38] sm:$0xff] %v983
        %s992 = sand.u32 %s132, 1
        %s993 = scalar_lea.sflag [#allocation4], %s992
        %s994 = sand.u32 %s132, 1
        %s995 = smul.addr %s994, 64
        %s996 = scalar_lea.vmem [#allocation10], %s995
        // Predicated region
        $region53: #{tpu_custom_call.1} parent=35 // pred_check
          %p997 = pneg %p142
        $region54: #{tpu_custom_call.1} parent=35 // pred_check_branch
          %999 = sbr.rel (%p997) target = $region56
        $region55: #{tpu_custom_call.1} parent=35 // pred_region
          %s1000 = smul.u32 8, %s25
          %1002 = vsyncadd %s993, 0
          %s1003 = smul.addr %s1000, 8
          %s1004 = scalar_lea.hbm %s4, %s1003
          %s1006 = sshll.u32 %s996, 4
          %s1007 = int_to_ptr.vmem [resolvable:$true] %s1006
          %s1008 = sshll.u32 %s1004, 4
          %s1009 = int_to_ptr.hbm [resolvable:$true] %s1008
          %1011 = dma.vmem_to_hbm [thread:$0]  %s1007, 1024, %s1009, %s993
        $region56: #{tpu_custom_call.1} parent=35 // pred_fallthru
          _
      $region36: #{tpu_custom_call.1} parent=5 // pred_fallthru
        _
      %p1012 = scmp.le.s32.totalorder 2, %s20
      // Predicated region
      $region57: #{tpu_custom_call.1} parent=5 // pred_check
        %p1013 = pneg %p1012
      $region58: #{tpu_custom_call.1} parent=5 // pred_check_branch
        %1015 = sbr.rel (%p1013) target = $region60
      $region59: #{tpu_custom_call.1} parent=5 // pred_region
        %s1016 = ssub.s32 %s20, 2
        // Predicated region
        $region61: #{tpu_custom_call.1} parent=59 // pred_check
          %p1017 = pneg %p148
        $region62: #{tpu_custom_call.1} parent=59 // pred_check_branch
          %1019 = sbr.rel (%p1017) target = $region64
        $region63: #{tpu_custom_call.1} parent=59 // pred_region
          %s1020 = sand.u32 %s133, 1
          %s1021 = scalar_lea.sflag [#allocation4], %s1020
          %s1022 = sand.u32 %s133, 1
          %s1023 = smul.addr %s1022, 64
          %s1024 = scalar_lea.vmem [#allocation10], %s1023
          %1026 = dma.done %s1021, 1024
        $region64: #{tpu_custom_call.1} parent=59 // pred_fallthru
          _
      $region60: #{tpu_custom_call.1} parent=5 // pred_fallthru
        _
    $region6: #{tpu_custom_call.1} parent=1 // loop_footer
      %s24 = sadd.s32 1, %s20
    $region7: #{tpu_custom_call.1} parent=1 // loop_footer_branch
      %19 = sbr.rel target = $region3
    $region8: #{tpu_custom_call.1} parent=1 // loop_exit
      _
    %1027 = vsyncpa [#allocation3], 1
    %s1028 = scalar_lea.sflag [#allocation3], 1
    %1029 = vsyncpa %s1028, 1
    %1030 = vsyncpa [#allocation6], 1
    %s1031 = scalar_lea.sflag [#allocation6], 1
    %1032 = vsyncpa %s1031, 1
    %1033 = vsyncpa [#allocation9], 1
    %s1034 = scalar_lea.sflag [#allocation9], 1
    %1035 = vsyncpa %s1034, 1
    %1036 = vsyncpa [#allocation4], 1
    %s1037 = scalar_lea.sflag [#allocation4], 1
    %1038 = vsyncpa %s1037, 1

</llo_original>
